<compile_context>
chip_gen: v7x
topology: tpu7x:2x2x1
jax: 0.10.0
libtpu: 0.0.40
codegen_flags: <defaults>
</compile_context>

<pallas_src>
import functools

import numpy as np

import jax
import jax.numpy as jnp
from jax.experimental import pallas as pl
from jax.experimental.pallas import tpu as pltpu

_LANE = 128
_SUBLANE = 8


def _round_up(v, m):
    return -(-v // m) * m


def _cdiv(a, b):
    return -(-a // b)


def _vmem_capacity_bytes():
    """Physical VMEM per TensorCore; conservative (v7x-sized) fallback."""
    try:
        cap = int(getattr(pltpu.get_tpu_info(), "vmem_capacity_bytes", 0))
        if cap > 0:
            return cap
    except Exception:
        pass
    return 64 * 1024 * 1024


def _mosaic_params(semantics, est_vmem_bytes, limit_cap):
    limit = int(min(max(int(est_vmem_bytes * 1.5), 16 * 1024 * 1024), limit_cap))
    return pltpu.CompilerParams(dimension_semantics=semantics,
                                vmem_limit_bytes=limit)


def _maybe_buffered_spec(block_shape, index_map, depth):
    """3-deep input pipelining for the streaming stats pass (optional feature;
    fall back to default double-buffering if unsupported)."""
    try:
        return pl.BlockSpec(block_shape, index_map, pipeline_mode=pl.Buffered(depth))
    except Exception:
        return pl.BlockSpec(block_shape, index_map)


# ----------------------------- kernels --------------------------------------


def _fused_kernel(x_ref, g_ref, b_ref, o_ref, *, eps, n_real, bessel):
    """Whole sample per grid step: robust two-pass stats + folded scale/shift."""
    x32 = x_ref[0].astype(jnp.float32)                    # (C, HW)
    mean = jnp.sum(x32) / n_real
    d = x32 - mean
    var = jnp.maximum(jnp.sum(d * d) / bessel, 0.0)       # unbiased (Bessel)
    inv = 1.0 / (jnp.sqrt(var) + eps)                     # torch adds eps to std
    scale = g_ref[...] * inv                               # (C, 1)
    shift = b_ref[...] - mean * scale                      # (C, 1)
    # Fresh cast for the store: no full f32 copy needs to stay live for
    # sub-32-bit inputs (cast fuses per-vreg into the elementwise write).
    o_ref[0] = (x_ref[0].astype(jnp.float32) * scale + shift).astype(o_ref.dtype)


def _tile_stats_kernel(x_ref, s_ref, m2_ref, *, hw, tl, c, mask_tail):
    """Per (sample, lane-tile) partial stats: tile sum and tile-centered M2.
    Combined afterwards with Chan's formula -> no catastrophic cancellation."""
    x = x_ref[0].astype(jnp.float32)                       # (C, TL)
    if mask_tail:
        k = pl.program_id(1)
        valid = jnp.minimum(hw - k * tl, tl)               # valid lanes this tile
        lane = jax.lax.broadcasted_iota(jnp.int32, (c, tl), 1)
        mask = lane < valid
        cnt = (valid * c).astype(jnp.float32)
        s = jnp.sum(jnp.where(mask, x, 0.0))
        m = s / cnt
        d = jnp.where(mask, x - m, 0.0)
    else:
        s = jnp.sum(x)
        m = s / float(c * tl)
        d = x - m
    m2 = jnp.sum(d * d)
    s_ref[...] = jnp.reshape(s, (1, 1, 1))
    m2_ref[...] = jnp.reshape(m2, (1, 1, 1))


def _scale_shift_kernel(x_ref, scale_ref, shift_ref, o_ref):
    """out = x * scale + shift with per-channel scale/shift (all stats folded)."""
    o_ref[0] = (x_ref[0].astype(jnp.float32) * scale_ref[0]
                + shift_ref[0]).astype(o_ref.dtype)


def _flat_idx(K):
    def idx(n, k):
        return (n * K + k, 0, 0)
    return idx


# ----------------------------- wrapper ---------------------------------------


def layernorm2d(x, gamma, beta, eps=1e-6, *, max_fused_vmem_bytes=None,
                lane_tile=None, force_split=False):
    """x: (N, C, H, W); gamma, beta: (1, C, 1, 1). Matches the PyTorch module."""
    N, C, H, W = x.shape
    HW = H * W
    n_real = C * HW
    bessel = max(n_real - 1, 1)          # guard degenerate C*H*W == 1
    itemsize = jnp.dtype(x.dtype).itemsize

    # Free views (contiguous collapse / expand): no pad / slice HBM round trips.
    xv = x.reshape(N, C, HW)
    g_col = gamma.reshape(C, 1).astype(jnp.float32)
    b_col = beta.reshape(C, 1).astype(jnp.float32)

    # ---- generation-aware VMEM budgets --------------------------------------
    vmem_cap = _vmem_capacity_bytes()
    small_vmem_chip = vmem_cap < 96 * 1024 * 1024          # v7x-class (64 MiB / TC)
    limit_cap = max(vmem_cap - 20 * 1024 * 1024, vmem_cap // 2)  # 108 MiB / 44 MiB
    if max_fused_vmem_bytes is None:
        fused_budget = (22 if small_vmem_chip else 88) * 1024 * 1024
    else:
        fused_budget = int(max_fused_vmem_bytes)

    # Footprint estimate: double-buffered in/out blocks + transient f32 temps,
    # accounting for sublane (C->8) and lane (HW->128) physical padding.
    Cp = _round_up(C, _SUBLANE)
    HWl = _round_up(HW, _LANE)
    est_fused = Cp * HWl * (4 * itemsize + 2 * 4)

    # v7x batch-1: keep both TensorCores busy via the (N,K)-parallel split path.
    sample_bytes = C * HW * itemsize
    prefer_split_for_cores = (small_vmem_chip and N < 2 and HW >= 2 * _LANE
                              and sample_bytes >= (1 << 20))

    use_fused = (est_fused <= fused_budget) and not (force_split or
                                                     prefer_split_for_cores)

    # ------------- fused single-pass path (sample fits in VMEM) -------------
    if use_fused:
        kernel = functools.partial(_fused_kernel, eps=float(eps),
                                   n_real=float(n_real), bessel=float(bessel))
        outv = pl.pallas_call(
            kernel,
            out_shape=jax.ShapeDtypeStruct((N, C, HW), x.dtype),
            grid_spec=pltpu.PrefetchScalarGridSpec(
                num_scalar_prefetch=0,
                grid=(N,),
                in_specs=[
                    pl.BlockSpec((1, C, HW), lambda n: (n, 0, 0)),
                    pl.BlockSpec((C, 1), lambda n: (0, 0)),
                    pl.BlockSpec((C, 1), lambda n: (0, 0)),
                ],
                out_specs=pl.BlockSpec((1, C, HW), lambda n: (n, 0, 0)),
            ),
            compiler_params=_mosaic_params(("parallel",), est_fused, limit_cap),
            cost_estimate=pl.CostEstimate(
                flops=int(6 * N * n_real),
                transcendentals=int(N),
                bytes_accessed=int(2 * N * n_real * itemsize)),
        )(xv, g_col, b_col)
        return outv.reshape(N, C, H, W)

    # ------------- split path: lane-tiled over the flattened spatial dim -----
    # TODO(synk): tile the channel axis too for extreme C with tiny HW (a single
    # (1, C, 128) block would not fit VMEM); not reachable for typical shapes.
    target_f32_bytes = (4 if small_vmem_chip else 8) * 1024 * 1024
    if lane_tile is not None:
        TL = int(lane_tile)
        if TL % _LANE:
            raise ValueError("lane_tile must be a multiple of 128")
    else:
        TL = max(_LANE, (target_f32_bytes // (Cp * 4)) // _LANE * _LANE)
    per_lane_bytes = Cp * (4 * itemsize + 2 * 4)          # block footprint / lane
    TL = min(TL, max(_LANE, (limit_cap // 2 // per_lane_bytes) // _LANE * _LANE))
    TL = min(TL, _round_up(HW, _LANE))
    if prefer_split_for_cores:                             # ensure >= 2 tiles
        TL = min(TL, max(_LANE, _round_up(_cdiv(HW, 2), _LANE)))
    K = _cdiv(HW, TL)
    mask_tail = (HW % TL) != 0
    est_split = Cp * TL * (4 * itemsize + 2 * 4)

    # pass 1: per-tile (sum, centered M2); both grid axes parallel.
    stats_kernel = functools.partial(_tile_stats_kernel, hw=HW, tl=TL, c=C,
                                     mask_tail=mask_tail)
    s_out, m2_out = pl.pallas_call(
        stats_kernel,
        out_shape=(jax.ShapeDtypeStruct((N * K, 1, 1), jnp.float32),
                   jax.ShapeDtypeStruct((N * K, 1, 1), jnp.float32)),
        grid_spec=pltpu.PrefetchScalarGridSpec(
            num_scalar_prefetch=0,
            grid=(N, K),
            in_specs=[_maybe_buffered_spec((1, C, TL), lambda n, k: (n, 0, k), 3)],
            out_specs=(pl.BlockSpec((1, 1, 1), _flat_idx(K)),
                       pl.BlockSpec((1, 1, 1), _flat_idx(K))),
        ),
        compiler_params=_mosaic_params(("parallel", "parallel"), est_split,
                                       limit_cap),
        cost_estimate=pl.CostEstimate(
            flops=int(4 * N * n_real),
            transcendentals=0,
            bytes_accessed=int(N * n_real * itemsize)),
    )(xv)

    # Tiny glue (O(N*K + N*C)): Chan's combine, then fold gamma/beta/mean/std/eps
    # into one per-channel (scale, shift) pair.
    counts = jnp.asarray(
        np.minimum(HW - np.arange(K, dtype=np.int64) * TL, TL).astype(np.float32)
        * C)                                                     # (K,)
    s = s_out.reshape(N, K)
    m2 = m2_out.reshape(N, K)
    mean = jnp.sum(s, axis=1) / float(n_real)                    # (N,)
    tile_mean = s / counts[None, :]
    m2_tot = jnp.sum(m2, axis=1) + jnp.sum(
        counts[None, :] * jnp.square(tile_mean - mean[:, None]), axis=1)
    var = jnp.maximum(m2_tot / float(bessel), 0.0)
    inv = 1.0 / (jnp.sqrt(var) + eps)                            # (N,)
    scale = g_col.reshape(1, C) * inv[:, None]                   # (N, C)
    shift = b_col.reshape(1, C) - mean[:, None] * scale

    # pass 2: out = x * scale + shift (both axes parallel -> both v7x TCs busy).
    outv = pl.pallas_call(
        _scale_shift_kernel,
        out_shape=jax.ShapeDtypeStruct((N, C, HW), x.dtype),
        grid_spec=pltpu.PrefetchScalarGridSpec(
            num_scalar_prefetch=0,
            grid=(N, K),
            in_specs=[
                pl.BlockSpec((1, C, TL), lambda n, k: (n, 0, k)),
                pl.BlockSpec((1, C, 1), lambda n, k: (n, 0, 0)),
                pl.BlockSpec((1, C, 1), lambda n, k: (n, 0, 0)),
            ],
            out_specs=pl.BlockSpec((1, C, TL), lambda n, k: (n, 0, k)),
        ),
        compiler_params=_mosaic_params(("parallel", "parallel"), est_split,
                                       limit_cap),
        cost_estimate=pl.CostEstimate(
            flops=int(2 * N * n_real),
            transcendentals=0,
            bytes_accessed=int(2 * N * n_real * itemsize)),
    )(xv, scale.reshape(N, C, 1), shift.reshape(N, C, 1))
    return outv.reshape(N, C, H, W)


def _reference(x, gamma, beta, eps=1e-6):
    xf = x.astype(jnp.float32)
    mean = jnp.mean(xf, axis=(1, 2, 3), keepdims=True)
    std = jnp.sqrt(jnp.var(xf, axis=(1, 2, 3), keepdims=True, ddof=1))  # unbiased
    y = (xf - mean) / (std + eps)
    return (gamma * y + beta).astype(x.dtype)


if __name__ == "__main__":
    key = jax.random.PRNGKey(0)
    eps = 1e-6

    def _check(x, gamma, beta, atol=1e-5, rtol=1e-5, **kw):
        out = jax.block_until_ready(layernorm2d(x, gamma, beta, eps=eps, **kw))
        ref = _reference(x, gamma, beta, eps=eps)
        assert out.shape == x.shape and out.dtype == x.dtype
        assert jnp.allclose(out.astype(jnp.float32), ref.astype(jnp.float32),
                            atol=atol, rtol=rtol), "mismatch vs reference"

    k1, k2, k3, k4, k5 = jax.random.split(key, 5)

    # 1) Canonical small shape with default parameter init; fused single-pass path.
    N, C, H, W = 2, 4, 16, 16
    x = jax.random.normal(k1, (N, C, H, W), dtype=jnp.float32)
    gamma = jnp.ones((1, C, 1, 1), jnp.float32)    # nn.Parameter(torch.ones)
    beta = jnp.zeros((1, C, 1, 1), jnp.float32)    # nn.Parameter(torch.zeros)
    _check(x, gamma, beta)

    # 2) Non-trivial affine params; force the split path (4 aligned lane tiles).
    N, C, H, W = 2, 4, 32, 32
    x = jax.random.normal(k2, (N, C, H, W), dtype=jnp.float32)
    gamma = jax.random.normal(k3, (1, C, 1, 1), dtype=jnp.float32)
    beta = jax.random.normal(k4, (1, C, 1, 1), dtype=jnp.float32)
    _check(x, gamma, beta, force_split=True, lane_tile=256)

    # 3) Spatial size not a multiple of 128 (ragged lane tail); fused path.
    N, C, H, W = 2, 4, 14, 14
    x = jax.random.normal(k5, (N, C, H, W), dtype=jnp.float32)
    gamma = 1.0 + 0.1 * jnp.arange(C, dtype=jnp.float32).reshape(1, C, 1, 1)
    beta = 0.05 * jnp.arange(C, dtype=jnp.float32).reshape(1, C, 1, 1)
    _check(x, gamma, beta)

    # 4) Forced split with an in-kernel-masked ragged tail (HW=400 -> 128/128/128/16).
    N, C, H, W = 2, 3, 20, 20
    x = jax.random.normal(k1, (N, C, H, W), dtype=jnp.float32)
    gamma = 1.0 + 0.1 * jnp.arange(C, dtype=jnp.float32).reshape(1, C, 1, 1)
    beta = 0.05 * jnp.arange(C, dtype=jnp.float32).reshape(1, C, 1, 1)
    _check(x, gamma, beta, force_split=True, lane_tile=128)

    # 5) bf16 activations (fused path; per-vreg cast, no resident f32 copy).
    N, C, H, W = 2, 8, 16, 16
    x = jax.random.normal(k2, (N, C, H, W), dtype=jnp.float32).astype(jnp.bfloat16)
    gamma = jnp.ones((1, C, 1, 1), jnp.float32)
    beta = jnp.zeros((1, C, 1, 1), jnp.float32)
    _check(x, gamma, beta, atol=3e-2, rtol=3e-2)

    print("KERNEL_OK")
</pallas_src>

<mosaic_0001>
module attributes {stable_mosaic.version = 11 : i64} {
  func.func @_fused_kernel(%arg0: i32, %arg1: memref<1x4x256xf32, #tpu.memory_space<vmem>>, %arg2: memref<4x1xf32, #tpu.memory_space<vmem>>, %arg3: memref<4x1xf32, #tpu.memory_space<vmem>>, %arg4: memref<1x4x256xf32, #tpu.memory_space<vmem>>) attributes {dimension_semantics = [#tpu.dimension_semantics<parallel>], iteration_bounds = array<i64: 2>, scalar_prefetch = 0 : i64, scratch_operands = 0 : i64, tpu.core_type = #tpu.core_type<tc>, window_params = [{transform_indices = @transform_0, window_bounds = array<i64: 1, 4, 256>}, {pipeline_mode = #tpu.pipeline_mode<synchronous>, transform_indices = @transform_1, window_bounds = array<i64: 4, 1>}, {pipeline_mode = #tpu.pipeline_mode<synchronous>, transform_indices = @transform_2, window_bounds = array<i64: 4, 1>}, {transform_indices = @transform_3, window_bounds = array<i64: 1, 4, 256>}]} {
    %c0 = arith.constant 0 : index
    %c0_0 = arith.constant 0 : index
    %c0_1 = arith.constant 0 : index
    %0 = vector.load %arg1[%c0, %c0_0, %c0_1] : memref<1x4x256xf32, #tpu.memory_space<vmem>>, vector<1x4x256xf32>
    %1 = vector.shape_cast %0 : vector<1x4x256xf32> to vector<4x256xf32>
    %2 = vector.shape_cast %1 : vector<4x256xf32> to vector<1x4x256xf32>
    %cst = arith.constant dense<0.000000e+00> : vector<1xf32>
    %3 = vector.multi_reduction <add>, %2, %cst [1, 2] : vector<1x4x256xf32> to vector<1xf32>
    %4 = vector.shape_cast %3 : vector<1xf32> to vector<1x1x1xf32>
    %5 = vector.extract %4[0, 0, 0] : f32 from vector<1x1x1xf32>
    %cst_2 = arith.constant 1.024000e+03 : f32
    %6 = arith.divf %5, %cst_2 : f32
    %7 = vector.broadcast %6 : f32 to vector<4x256xf32>
    %8 = arith.subf %1, %7 : vector<4x256xf32>
    %9 = arith.mulf %8, %8 : vector<4x256xf32>
    %10 = vector.shape_cast %9 : vector<4x256xf32> to vector<1x4x256xf32>
    %cst_3 = arith.constant dense<0.000000e+00> : vector<1xf32>
    %11 = vector.multi_reduction <add>, %10, %cst_3 [1, 2] : vector<1x4x256xf32> to vector<1xf32>
    %12 = vector.shape_cast %11 : vector<1xf32> to vector<1x1x1xf32>
    %13 = vector.extract %12[0, 0, 0] : f32 from vector<1x1x1xf32>
    %cst_4 = arith.constant 1.023000e+03 : f32
    %14 = arith.divf %13, %cst_4 : f32
    %cst_5 = arith.constant 0.000000e+00 : f32
    %15 = arith.maximumf %14, %cst_5 : f32
    %16 = math.sqrt %15 : f32
    %cst_6 = arith.constant 9.99999997E-7 : f32
    %17 = arith.addf %16, %cst_6 : f32
    %cst_7 = arith.constant 1.000000e+00 : f32
    %18 = arith.divf %cst_7, %17 : f32
    %c0_8 = arith.constant 0 : index
    %c0_9 = arith.constant 0 : index
    %19 = vector.load %arg2[%c0_8, %c0_9] : memref<4x1xf32, #tpu.memory_space<vmem>>, vector<4x1xf32>
    %20 = vector.broadcast %18 : f32 to vector<4x1xf32>
    %21 = arith.mulf %19, %20 : vector<4x1xf32>
    %c0_10 = arith.constant 0 : index
    %c0_11 = arith.constant 0 : index
    %22 = vector.load %arg3[%c0_10, %c0_11] : memref<4x1xf32, #tpu.memory_space<vmem>>, vector<4x1xf32>
    %23 = vector.broadcast %6 : f32 to vector<4x1xf32>
    %24 = arith.mulf %23, %21 : vector<4x1xf32>
    %25 = arith.subf %22, %24 : vector<4x1xf32>
    %c0_12 = arith.constant 0 : index
    %c0_13 = arith.constant 0 : index
    %c0_14 = arith.constant 0 : index
    %26 = vector.load %arg1[%c0_12, %c0_13, %c0_14] : memref<1x4x256xf32, #tpu.memory_space<vmem>>, vector<1x4x256xf32>
    %27 = vector.shape_cast %26 : vector<1x4x256xf32> to vector<4x256xf32>
    %28 = vector.broadcast %21 : vector<4x1xf32> to vector<4x256xf32>
    %29 = arith.mulf %27, %28 : vector<4x256xf32>
    %30 = vector.broadcast %25 : vector<4x1xf32> to vector<4x256xf32>
    %31 = arith.addf %29, %30 : vector<4x256xf32>
    %c0_15 = arith.constant 0 : index
    %c0_16 = arith.constant 0 : index
    %c0_17 = arith.constant 0 : index
    %32 = vector.load %arg4[%c0_15, %c0_16, %c0_17] : memref<1x4x256xf32, #tpu.memory_space<vmem>>, vector<1x4x256xf32>
    %33 = vector.shape_cast %32 : vector<1x4x256xf32> to vector<4x256xf32>
    %34 = vector.shape_cast %31 : vector<4x256xf32> to vector<1x4x256xf32>
    tpu.vector_store %arg4[%c0_15, %c0_16, %c0_17], %34 {strides = array<i32>} : memref<1x4x256xf32, #tpu.memory_space<vmem>>, vector<1x4x256xf32>,
    return
  }
  func.func @transform_0(%arg0: i32) -> (i32, i32, i32) {
    %c0_i32 = arith.constant 0 : i32
    %c0_i32_0 = arith.constant 0 : i32
    %c0_i32_1 = arith.constant 0 : i32
    return %arg0, %c0_i32, %c0_i32_0 : i32, i32, i32
  }
  func.func @transform_1(%arg0: i32) -> (i32, i32) {
    %c0_i32 = arith.constant 0 : i32
    %c0_i32_0 = arith.constant 0 : i32
    %c0_i32_1 = arith.constant 0 : i32
    return %c0_i32, %c0_i32_0 : i32, i32
  }
  func.func @transform_2(%arg0: i32) -> (i32, i32) {
    %c0_i32 = arith.constant 0 : i32
    %c0_i32_0 = arith.constant 0 : i32
    %c0_i32_1 = arith.constant 0 : i32
    return %c0_i32, %c0_i32_0 : i32, i32
  }
  func.func @transform_3(%arg0: i32) -> (i32, i32, i32) {
    %c0_i32 = arith.constant 0 : i32
    %c0_i32_0 = arith.constant 0 : i32
    %c0_i32_1 = arith.constant 0 : i32
    return %arg0, %c0_i32, %c0_i32_0 : i32, i32, i32
  }
}

</mosaic_0001>

<llo_original>
// kernel: tpu_custom_call.1
$region0: #{tpu_custom_call.1}
  #allocation0 [shape = 'u32[]', space=smem, size = 0x4, offset = 0x4, fixed_abs, tag = 'smem constant byte address 0x4 - core index']
  #allocation1 [shape = 'u32[144,128]{1,0:T(1,128)}', space=vmem, size = 0x12000, scoped, tag = 'internal scratch']
  %s0 = inlined_call_operand.hbm [shape: f32[2,4,256], index: 0, kind: input, shape index: {}]
  %s1 = inlined_call_operand.vmem [shape: f32[4,1], index: 1, kind: input, shape index: {}]
  %s2 = inlined_call_operand.vmem [shape: f32[4,1], index: 2, kind: input, shape index: {}]
  %s3 = inlined_call_operand.hbm [shape: f32[2,4,256], index: 3, kind: output, shape index: {}]
  %s4 = sld [smem:[#allocation0]]
  $region49: #{tpu_custom_call.1} parent=0
    _
  %s6 = ssub.s32 1, %s4
  %s7 = scalar_select 0, %s6, %s4
  $region1: #{tpu_custom_call.1} parent=0
    #allocation2 [shape = 'u8[8192]{0}', space=vmem, size = 0x2000, scoped, tag = 'input window, operand 0']
    #allocation3 [shape = 's32[2]{0}', space=sflag, size = 0x8, scoped, tag = 'scoped memory for tpu_custom_call.1']
    #allocation4 [shape = 's32[2]{0}', space=sflag, size = 0x8, scoped, tag = 'scoped memory for tpu_custom_call.1']
    #allocation5 [shape = 'u8[8192]{0}', space=vmem, size = 0x2000, scoped, tag = 'output window, operand 0']
    %8 = vsyncpa [#allocation3], 0
    %s9 = scalar_lea.sflag [#allocation3], 1
    %10 = vsyncpa %s9, 0
    %11 = vsyncpa [#allocation4], 0
    %s12 = scalar_lea.sflag [#allocation4], 1
    %13 = vsyncpa %s12, 0
    loop: start=0, step=1, limit=4
    $region2: #{tpu_custom_call.1} parent=1 // loop_pre_header
      _
    $region3: #{tpu_custom_call.1} parent=1 // loop_header
      %s15 = sphi 0, %s19
      %p16 = scmp.ge.s32.totalorder %s15, 4
      %s25 = sphi 0, %s27
      %s28 = sphi 0, %s25
      %s29 = sphi 0, %s28
      %s45 = sphi 0, %s29
      %s49 = sphi 0, %s49
      %s51 = sphi 0, %s49
      %s52 = sphi 0, %s51
      %s66 = sphi 0, %s52
      %s70 = sphi 0, %s70
      %s72 = sphi 0, %s70
      %s73 = sphi 0, %s72
      %s87 = sphi 0, %s73
      %s93 = sphi 0, %s95
      %s96 = sphi 0, %s93
      %s97 = sphi 0, %s96
      %s113 = sphi 0, %s97
    $region4: #{tpu_custom_call.1} parent=1 // loop_header_branch
      %18 = sbr.rel (%p16) target = $region8
    $region5: #{tpu_custom_call.1} parent=1 // loop_body
      %s20 = ssub.s32 %s15, 1
      %s21 = ssub.s32 %s15, 2
      %s22 = sadd.s32 %s15, 1
      %s23 = ssub.s32 %s15, %s22
      %p24 = scmp.eq.s32.totalorder %s23, 0
      %s26 = sadd.s32 %s25, 1
      %s27 = scalar_select %p24, %s25, %s26
      %p30 = pneg %p24
      %p31 = scmp.eq.s32.totalorder %s15, 1
      %p32 = por %p30, %p31
      %p33 = scmp.ne.s32.totalorder %s25, %s28
      %p34 = scmp.eq.s32.totalorder %s15, 0
      %p35 = por %p33, %p34
      %p36 = scmp.ne.s32.totalorder %s25, %s28
      %p37 = scmp.eq.s32.totalorder %s20, 1
      %p38 = por %p36, %p37
      %p39 = scmp.ne.s32.totalorder %s28, %s29
      %p40 = scmp.eq.s32.totalorder %s20, 0
      %p41 = por %p39, %p40
      %p42 = scmp.ne.s32.totalorder %s28, %s29
      %p43 = scmp.eq.s32.totalorder %s21, 1
      %p44 = por %p42, %p43
      %p46 = scmp.ne.s32.totalorder %s29, %s45
      %p47 = scmp.eq.s32.totalorder %s21, 0
      %p48 = por %p46, %p47
      %s50 = sadd.s32 %s49, 1
      %p53 = scmp.eq.s32.totalorder %s15, 1
      %p54 = scmp.ne.s32.totalorder %s49, %s51
      %p55 = scmp.eq.s32.totalorder %s15, 0
      %p56 = por %p54, %p55
      %p57 = scmp.ne.s32.totalorder %s49, %s51
      %p58 = scmp.eq.s32.totalorder %s20, 1
      %p59 = por %p57, %p58
      %p60 = scmp.ne.s32.totalorder %s51, %s52
      %p61 = scmp.eq.s32.totalorder %s20, 0
      %p62 = por %p60, %p61
      %p63 = scmp.ne.s32.totalorder %s51, %s52
      %p64 = scmp.eq.s32.totalorder %s21, 1
      %p65 = por %p63, %p64
      %p67 = scmp.ne.s32.totalorder %s52, %s66
      %p68 = scmp.eq.s32.totalorder %s21, 0
      %p69 = por %p67, %p68
      %s71 = sadd.s32 %s70, 1
      %p74 = scmp.eq.s32.totalorder %s15, 1
      %p75 = scmp.ne.s32.totalorder %s70, %s72
      %p76 = scmp.eq.s32.totalorder %s15, 0
      %p77 = por %p75, %p76
      %p78 = scmp.ne.s32.totalorder %s70, %s72
      %p79 = scmp.eq.s32.totalorder %s20, 1
      %p80 = por %p78, %p79
      %p81 = scmp.ne.s32.totalorder %s72, %s73
      %p82 = scmp.eq.s32.totalorder %s20, 0
      %p83 = por %p81, %p82
      %p84 = scmp.ne.s32.totalorder %s72, %s73
      %p85 = scmp.eq.s32.totalorder %s21, 1
      %p86 = por %p84, %p85
      %p88 = scmp.ne.s32.totalorder %s73, %s87
      %p89 = scmp.eq.s32.totalorder %s21, 0
      %p90 = por %p88, %p89
      %s91 = ssub.s32 %s15, %s22
      %p92 = scmp.eq.s32.totalorder %s91, 0
      %s94 = sadd.s32 %s93, 1
      %s95 = scalar_select %p92, %s93, %s94
      %p98 = pneg %p92
      %p99 = scmp.eq.s32.totalorder %s15, 1
      %p100 = por %p98, %p99
      %p101 = scmp.ne.s32.totalorder %s93, %s96
      %p102 = scmp.eq.s32.totalorder %s15, 0
      %p103 = por %p101, %p102
      %p104 = scmp.ne.s32.totalorder %s93, %s96
      %p105 = scmp.eq.s32.totalorder %s20, 1
      %p106 = por %p104, %p105
      %p107 = scmp.ne.s32.totalorder %s96, %s97
      %p108 = scmp.eq.s32.totalorder %s20, 0
      %p109 = por %p107, %p108
      %p110 = scmp.ne.s32.totalorder %s96, %s97
      %p111 = scmp.eq.s32.totalorder %s21, 1
      %p112 = por %p110, %p111
      %p114 = scmp.ne.s32.totalorder %s97, %s113
      %p115 = scmp.eq.s32.totalorder %s21, 0
      %p116 = por %p114, %p115
      %p117 = scmp.le.s32.totalorder 1, %s15
      %p118 = scmp.lt.s32.totalorder %s15, 3
      %p119 = pnand %p117, %p118
      %p120 = pneg %p119
      // Predicated region
      $region9: #{tpu_custom_call.1} parent=5 // pred_check
        _
      $region10: #{tpu_custom_call.1} parent=5 // pred_check_branch
        %122 = sbr.rel (%p119) target = $region12
      $region11: #{tpu_custom_call.1} parent=5 // pred_region
        %s123 = ssub.s32 %s15, 1
        // Predicated region
        $region13: #{tpu_custom_call.1} parent=11 // pred_check
          %p124 = pneg %p62
        $region14: #{tpu_custom_call.1} parent=11 // pred_check_branch
          %126 = sbr.rel (%p124) target = $region16
        $region15: #{tpu_custom_call.1} parent=11 // pred_region
          _
        $region16: #{tpu_custom_call.1} parent=11 // pred_fallthru
          _
        // Predicated region
        $region17: #{tpu_custom_call.1} parent=11 // pred_check
          %p127 = pneg %p83
        $region18: #{tpu_custom_call.1} parent=11 // pred_check_branch
          %129 = sbr.rel (%p127) target = $region20
        $region19: #{tpu_custom_call.1} parent=11 // pred_region
          _
        $region20: #{tpu_custom_call.1} parent=11 // pred_fallthru
          _
      $region12: #{tpu_custom_call.1} parent=5 // pred_fallthru
        _
      %p130 = scmp.lt.s32.totalorder %s15, 2
      // Predicated region
      $region21: #{tpu_custom_call.1} parent=5 // pred_check
        %p131 = pneg %p130
      $region22: #{tpu_custom_call.1} parent=5 // pred_check_branch
        %133 = sbr.rel (%p131) target = $region24
      $region23: #{tpu_custom_call.1} parent=5 // pred_region
        // Predicated region
        $region25: #{tpu_custom_call.1} parent=23 // pred_check
          %p134 = pneg %p35
        $region26: #{tpu_custom_call.1} parent=23 // pred_check_branch
          %136 = sbr.rel (%p134) target = $region28
        $region27: #{tpu_custom_call.1} parent=23 // pred_region
          %s137 = sand.u32 %s25, 1
          %s138 = scalar_lea.sflag [#allocation3], %s137
          %s139 = sand.u32 %s25, 1
          %s140 = smul.addr %s139, 8
          %s141 = scalar_lea.vmem [#allocation2], %s140
          %s143 = ssub.s32 128, 128
          %144 = vsyncadd %s138, %s143
          %s145 = smul.addr %s15, 2
          %s146 = smul.addr %s145, 64
          %s147 = scalar_lea.hbm %s0, %s146
          %s149 = sshll.u32 %s141, 4
          %s150 = int_to_ptr.vmem [resolvable:$true] %s149
          %152 = dma.hbm_to_vmem [thread:$0]  %s147, 128, %s150, %s138
        $region28: #{tpu_custom_call.1} parent=23 // pred_fallthru
          _
      $region24: #{tpu_custom_call.1} parent=5 // pred_fallthru
        _
      %p153 = scmp.le.s32.totalorder 1, %s15
      %p154 = scmp.lt.s32.totalorder %s15, 3
      %p155 = pnand %p153, %p154
      %p156 = pneg %p155
      // Predicated region
      $region29: #{tpu_custom_call.1} parent=5 // pred_check
        _
      $region30: #{tpu_custom_call.1} parent=5 // pred_check_branch
        %158 = sbr.rel (%p155) target = $region32
      $region31: #{tpu_custom_call.1} parent=5 // pred_region
        %s159 = ssub.s32 %s15, 1
        %s160 = sand.u32 %s28, 1
        %s161 = scalar_lea.sflag [#allocation3], %s160
        %s162 = sand.u32 %s28, 1
        %s163 = smul.addr %s162, 8
        %s164 = scalar_lea.vmem [#allocation2], %s163
        // Predicated region
        $region33: #{tpu_custom_call.1} parent=31 // pred_check
          %p165 = pneg %p41
        $region34: #{tpu_custom_call.1} parent=31 // pred_check_branch
          %167 = sbr.rel (%p165) target = $region36
        $region35: #{tpu_custom_call.1} parent=31 // pred_region
          %168 = dma.done %s161, 128
        $region36: #{tpu_custom_call.1} parent=31 // pred_fallthru
          _
        %s169 = sand.u32 %s28, 1
        %s170 = scalar_lea.sflag [#allocation3], %s169
        %s171 = sand.u32 %s28, 1
        %s172 = smul.addr %s171, 8
        %s173 = scalar_lea.vmem [#allocation2], %s172
        %p174 = pneg %p41
        %p175 = pneg %p38
        %p176 = pneg %p62
        %p177 = pneg %p59
        %p178 = pneg %p83
        %p179 = pneg %p80
        %p180 = pneg %p109
        %p181 = pneg %p106
        %s182 = sand.u32 %s96, 1
        %s183 = scalar_lea.sflag [#allocation4], %s182
        %s184 = sand.u32 %s96, 1
        %s185 = smul.addr %s184, 8
        %s186 = scalar_lea.vmem [#allocation5], %s185
        %v187 = vld [vmem:[%s164] sm:$0xff]
        %v189 = vcombine.high %v187, %v187
        %vm191 = vcmask 1043456
        %v192 = vsel %vm191, %v187, 0.0
        %v193 = vsel %vm191, %v189, 0.0
        %v194 = vadd.f32 %v192, %v193
        %195 = vadd.xlane.f32.xlu0 %v194
        %v196 = vpop.xlane.xlu0 %195
        %v197 = vrot.slane %v196, 4
        %v198 = vadd.f32 %v196, %v197
        %v199 = vrot.slane %v198, 2
        %v200 = vadd.f32 %v198, %v199
        %v201 = vrot.slane %v200, 1
        %v202 = vadd.f32 %v200, %v201
        %s203 = vtos %v202
        %v204 = vrcp.pop 1024.0
        %s205 = vtos %v204
        %s206 = smul.f32 %s203, %s205
        %v207 = vstv %s206
        %v208 = vsub.f32 %v187, %v207
        %v209 = vmul.f32 %v208, %v208
        %v211 = vcombine.high %v209, %v209
        %v213 = vsel %vm191, %v209, 0.0
        %v214 = vsel %vm191, %v211, 0.0
        %v215 = vadd.f32 %v213, %v214
        %216 = vadd.xlane.f32.xlu0 %v215
        %v217 = vpop.xlane.xlu0 %216
        %v218 = vrot.slane %v217, 4
        %v219 = vadd.f32 %v217, %v218
        %v220 = vrot.slane %v219, 2
        %v221 = vadd.f32 %v219, %v220
        %v222 = vrot.slane %v221, 1
        %v223 = vadd.f32 %v221, %v222
        %s224 = vtos %v223
        %v225 = vrcp.pop 1023.0
        %s226 = vtos %v225
        %s227 = smul.f32 %s224, %s226
        %s228 = smax.f32 %s227, 0.0
        %v229 = vstv %s228
        %v230 = vrsqrt.pop %v229
        %v231 = vmul.f32 %v229, %v230
        %vm232 = vcmp.eq.f32.partialorder %v229, inf
        %v233 = vsel %vm232, %v229, %v231
        %vm234 = vcmp.eq.f32.partialorder %v229, 0.0
        %v235 = vand.u32 %v229, 2147483648
        %v236 = vsel %vm234, %v235, %v233
        %s237 = vtos %v236
        %s238 = sadd.f32 %s237, 1e-06
        %v239 = vstv %s238
        %v240 = vrcp.pop %v239
        %s241 = vtos %v240
        %v242 = vld [vmem:[%s1] sm:$0xf]
        %v243 = vstv %s241
        %v244 = vmul.f32 %v242, %v243
        %v245 = vld [vmem:[%s2] sm:$0xf]
        %v246 = vmul.f32 %v207, %v244
        %v247 = vsub.f32 %v245, %v246
        %249 = vset.pattern.permute.xlu0 0
        %250 = vperm.xlu0 %249, %v244
        %v251 = vpop.permute.xlu0 %250
        %v253 = vunpack.c.l.s4 839922192
        %v254 = vunpack.c.0.s8 %v253
        %v255 = vlaneseq
        %v256 = vshrl.u32 %v255, 7
        %v257 = vsub.s32 %v254, %v256
        %v258 = vrot.slane %v251, %v257
        %v260 = vmul.f32 %v187, %v258
        %262 = vset.pattern.permute.xlu0 0
        %263 = vperm.xlu0 %262, %v247
        %v264 = vpop.permute.xlu0 %263
        %v266 = vunpack.c.l.s4 839922192
        %v267 = vunpack.c.0.s8 %v266
        %v268 = vlaneseq
        %v269 = vshrl.u32 %v268, 7
        %v270 = vsub.s32 %v267, %v269
        %v271 = vrot.slane %v264, %v270
        %v273 = vadd.f32 %v260, %v271
        %274 = vst [vmem:[%s186] sm:$0xff] %v273
        %s275 = sand.u32 %s96, 1
        %s276 = scalar_lea.sflag [#allocation4], %s275
        %s277 = sand.u32 %s96, 1
        %s278 = smul.addr %s277, 8
        %s279 = scalar_lea.vmem [#allocation5], %s278
        // Predicated region
        $region37: #{tpu_custom_call.1} parent=31 // pred_check
          %p280 = pneg %p106
        $region38: #{tpu_custom_call.1} parent=31 // pred_check_branch
          %282 = sbr.rel (%p280) target = $region40
        $region39: #{tpu_custom_call.1} parent=31 // pred_region
          %s284 = ssub.s32 128, 128
          %285 = vsyncadd %s276, %s284
          %s286 = smul.addr %s20, 2
          %s287 = smul.addr %s286, 64
          %s288 = scalar_lea.hbm %s3, %s287
          %s290 = sshll.u32 %s279, 4
          %s291 = int_to_ptr.vmem [resolvable:$true] %s290
          %293 = dma.vmem_to_hbm [thread:$0]  %s291, 128, %s288, %s276
        $region40: #{tpu_custom_call.1} parent=31 // pred_fallthru
          _
      $region32: #{tpu_custom_call.1} parent=5 // pred_fallthru
        _
      %p294 = scmp.le.s32.totalorder 2, %s15
      // Predicated region
      $region41: #{tpu_custom_call.1} parent=5 // pred_check
        %p295 = pneg %p294
      $region42: #{tpu_custom_call.1} parent=5 // pred_check_branch
        %297 = sbr.rel (%p295) target = $region44
      $region43: #{tpu_custom_call.1} parent=5 // pred_region
        %s298 = ssub.s32 %s15, 2
        // Predicated region
        $region45: #{tpu_custom_call.1} parent=43 // pred_check
          %p299 = pneg %p112
        $region46: #{tpu_custom_call.1} parent=43 // pred_check_branch
          %301 = sbr.rel (%p299) target = $region48
        $region47: #{tpu_custom_call.1} parent=43 // pred_region
          %s302 = sand.u32 %s97, 1
          %s303 = scalar_lea.sflag [#allocation4], %s302
          %s304 = sand.u32 %s97, 1
          %s305 = smul.addr %s304, 8
          %s306 = scalar_lea.vmem [#allocation5], %s305
          %307 = dma.done %s303, 128
        $region48: #{tpu_custom_call.1} parent=43 // pred_fallthru
          _
      $region44: #{tpu_custom_call.1} parent=5 // pred_fallthru
        _
    $region6: #{tpu_custom_call.1} parent=1 // loop_footer
      %s19 = sadd.s32 1, %s15
    $region7: #{tpu_custom_call.1} parent=1 // loop_footer_branch
      %14 = sbr.rel target = $region3
    $region8: #{tpu_custom_call.1} parent=1 // loop_exit
      _
    %308 = vsyncpa [#allocation3], 1
    %s309 = scalar_lea.sflag [#allocation3], 1
    %310 = vsyncpa %s309, 1
    %311 = vsyncpa [#allocation4], 1
    %s312 = scalar_lea.sflag [#allocation4], 1
    %313 = vsyncpa %s312, 1

</llo_original>
